<compile_context>
chip_gen: v5e
topology: v5e:2x2
jax: 0.10.0
libtpu: 0.0.40
codegen_flags: <defaults>
</compile_context>

<pallas_src>
import math
from functools import partial

import jax
import jax.numpy as jnp
from jax import lax
from jax.experimental import pallas as pl
from jax.experimental.pallas import tpu as pltpu


def _layernorm(x, w, b, eps=1e-5):
    # PyTorch nn.LayerNorm over the last dim, biased variance. f32 statistics.
    mean = jnp.mean(x, axis=-1, keepdims=True)
    var = jnp.mean((x - mean) ** 2, axis=-1, keepdims=True)
    return (x - mean) * lax.rsqrt(var + eps) * w + b


def _encoder_layer_kernel(*refs, d_h, fuse_qkv, cdt):
    if fuse_qkv:
        (x_ref, wqkv_ref, bqkv_ref, wo_ref, w1_ref, w2_ref,
         ln0_w_ref, ln0_b_ref, ln1_w_ref, ln1_b_ref, o_ref) = refs
    else:
        (x_ref, wq_ref, bq_ref, wk_ref, bk_ref, wv_ref, bv_ref,
         wo_ref, w1_ref, w2_ref,
         ln0_w_ref, ln0_b_ref, ln1_w_ref, ln1_b_ref, o_ref) = refs

    Bt, S, D = x_ref.shape

    x = x_ref[...]                          # (Bt, S, D)
    x2 = x.reshape(Bt * S, D)               # fill the MXU M dimension
    x2c = x2.astype(cdt)                    # MXU operand dtype (bf16 by default for f32 in)

    # --- attention front-end: folded Q/K/V projections ---
    # Weights already include the shared per-head projection AND the 1/sqrt(d_h)
    # score scaling (folded into the Q weight/bias in the wrapper, in f32).
    if fuse_qkv:
        qkv = jnp.dot(x2c, wqkv_ref[...],
                      preferred_element_type=jnp.float32) + bqkv_ref[...]
        nq = qkv[:, 0 * d_h:1 * d_h]
        nk = qkv[:, 1 * d_h:2 * d_h]
        nv = qkv[:, 2 * d_h:3 * d_h]
    else:
        nq = jnp.dot(x2c, wq_ref[...], preferred_element_type=jnp.float32) + bq_ref[...]
        nk = jnp.dot(x2c, wk_ref[...], preferred_element_type=jnp.float32) + bk_ref[...]
        nv = jnp.dot(x2c, wv_ref[...], preferred_element_type=jnp.float32) + bv_ref[...]

    # reshape in f32 (layout-free: S multiple of sublane count), cast afterwards
    nq3 = nq.reshape(Bt, S, d_h).astype(cdt)
    nk3 = nk.reshape(Bt, S, d_h).astype(cdt)
    nv3 = nv.reshape(Bt, S, d_h).astype(cdt)

    # scores: batched contraction over the head dim; no materialized nk.T.
    scores = lax.dot_general(
        nq3, nk3, (((2,), (2,)), ((0,), (0,))),
        preferred_element_type=jnp.float32)                  # (Bt, S, S), f32

    scores = scores - jnp.max(scores, axis=-1, keepdims=True)
    p = jnp.exp(scores)                                      # f32 (see bf16-exp TODO)
    denom = jnp.sum(p, axis=-1, keepdims=True)               # f32 row sums
    exact = jnp.dtype(cdt) == jnp.dtype(jnp.float32)
    inv = pl.reciprocal(denom, approx=not exact)             # EUP slot in the fast path

    head = lax.dot_general(
        p.astype(cdt), nv3, (((2,), (1,)), ((0,), (0,))),
        preferred_element_type=jnp.float32)                  # (Bt, S, d_h)
    head = head * inv     # fold softmax denominator into (S, d_h), not (S, S)

    # Output projection. wo_ref is the head-block sum of the (D, D) projection,
    # exactly equivalent to concat([head] * num_heads, -1) @ wo — do NOT "fix"
    # this into real multi-head attention; the PyTorch module shares one head.
    mh = jnp.dot(head.reshape(Bt * S, d_h).astype(cdt), wo_ref[...],
                 preferred_element_type=jnp.float32)         # (Bt*S, D)
    # attention dropout -> identity (eval)

    # --- residual + LayerNorm 0 (f32 statistics) ---
    h = _layernorm(x2.astype(jnp.float32) + mh, ln0_w_ref[...], ln0_b_ref[...])

    # --- FeedForward (ReLU MLP, no biases) ---
    ff = jnp.dot(h.astype(cdt), w1_ref[...], preferred_element_type=jnp.float32)
    ff = jnp.maximum(ff, 0.0)
    ff = jnp.dot(ff.astype(cdt), w2_ref[...], preferred_element_type=jnp.float32)
    # FFN dropout -> identity (eval)

    # --- residual + LayerNorm 1 ---
    y = _layernorm(ff + h, ln1_w_ref[...], ln1_b_ref[...])
    # final dropout -> identity (eval)

    o_ref[...] = y.reshape(Bt, S, D).astype(o_ref.dtype)


def _vmem_capacity_bytes():
    try:
        cap = getattr(pltpu.get_tpu_info(), "vmem_capacity_bytes", None)
        if cap:
            return int(cap)
    except Exception:
        pass
    return None


def _pick_batch_tile(B, S, D, x_itemsize, vmem_bytes, min_grid_steps):
    """Largest batch tile whose per-step working set fits ~40% of VMEM, while keeping
    at least `min_grid_steps` grid steps (set 2 on v7x for its two TensorCores)."""
    budget = int(0.4 * vmem_bytes)

    def footprint(bt):
        rows = bt * S
        return (2 * 2 * rows * D * x_itemsize      # double-buffered x / out blocks
                + 3 * bt * S * S * 4               # f32 scores + exp copies
                + 6 * rows * D * 4)                # f32 residual / LN / FFN intermediates

    best = None
    for bt in range(1, B + 1):
        if B % bt or (B // bt) < min_grid_steps:
            continue
        if footprint(bt) <= budget and (best is None or bt > best):
            best = bt
    if best is None:
        # No divisor fits the budget (huge S) -> smallest legal tile.
        # TODO(synk): at this point the flash-style query-tile grid axis is required.
        best = 1
    return best


def encoder_layer(x, params, *, num_heads, compute_dtype=None, batch_tile=None,
                  min_grid_steps=1, single_buffer_weights=False):
    """Fused Pallas kernel for the EncoderLayer forward pass (eval mode).

    compute_dtype:        MXU operand dtype; None -> bfloat16 when x is float32
                          (accumulation / statistics stay f32), else x.dtype.
    min_grid_steps:       set 2 on v7x so the "parallel" batch axis spans both
                          TensorCores; leave 1 on v5e/v6e (fewest grid steps wins).
    single_buffer_weights: single-buffer the grid-invariant weight blocks
                          (pl.Buffered(1)); recommended on v7x at production sizes.
    """
    (wq, wk, wv, wmq, bmq, wmk, bmk, wmv, bmv,
     wo, w1, w2, ln0_w, ln0_b, ln1_w, ln1_b) = params

    B, S, D = x.shape
    d_h = D // num_heads
    inv_scale = 1.0 / math.sqrt(d_h)

    if compute_dtype is None:
        compute_dtype = jnp.bfloat16 if x.dtype == jnp.float32 else x.dtype
    cdt = jnp.dtype(compute_dtype)
    f32 = jnp.float32

    # The (Bt, S, D) <-> (Bt*S, D) reshapes in the kernel are layout-free only if S is
    # a multiple of the input dtype's sublane packing (8 rows/vreg for f32).
    sublane = 8 * 4 // jnp.dtype(x.dtype).itemsize
    assert S % sublane == 0, f"S={S} must be a multiple of {sublane} for layout-free reshapes"

    # --- algebraic weight folding (once, outside the kernel, always in f32) ---
    #   (x @ wq) @ wmq + bmq == x @ (wq @ wmq) + bmq      (drops 3 matmuls)
    #   score scaling folded into the Q weight/bias        (drops S*S divides)
    #   concat([head]*H, -1) @ wo == head @ sum_of_head_blocks(wo)   (drops jnp.tile)
    wq_f = (wq.astype(f32) @ wmq.astype(f32)) * inv_scale
    bq_f = bmq.astype(f32) * inv_scale
    wk_f = wk.astype(f32) @ wmk.astype(f32)
    bk_f = bmk.astype(f32)
    wv_f = wv.astype(f32) @ wmv.astype(f32)
    bv_f = bmv.astype(f32)
    wo_f = wo.astype(f32).reshape(num_heads, d_h, D).sum(axis=0)

    # Fused QKV matmul (one (D, 3*d_h) weight) triples MXU column fill; only enabled
    # when the result slices stay lane-aligned (review caveat: d_h % 128 == 0).
    fuse_qkv = (d_h % 128 == 0)

    ln_args = (ln0_w.astype(f32), ln0_b.astype(f32), ln1_w.astype(f32), ln1_b.astype(f32))
    if fuse_qkv:
        wqkv = jnp.concatenate([wq_f, wk_f, wv_f], axis=1).astype(cdt)
        bqkv = jnp.concatenate([bq_f, bk_f, bv_f], axis=1)          # bias add stays f32
        weight_args = (wqkv, bqkv, wo_f.astype(cdt),
                       w1.astype(cdt), w2.astype(cdt)) + ln_args
    else:
        weight_args = (wq_f.astype(cdt), bq_f, wk_f.astype(cdt), bk_f,
                       wv_f.astype(cdt), bv_f, wo_f.astype(cdt),
                       w1.astype(cdt), w2.astype(cdt)) + ln_args

    # --- generation-aware tiling ---
    vmem_cap = _vmem_capacity_bytes()                 # 128 MiB v5e/v6e, 64 MiB v7x
    vmem_for_tiling = vmem_cap if vmem_cap else (32 << 20)
    if batch_tile is None:
        batch_tile = _pick_batch_tile(B, S, D, jnp.dtype(x.dtype).itemsize,
                                      vmem_for_tiling, min_grid_steps)
    assert B % batch_tile == 0

    def _invariant_spec(a):
        ndim = a.ndim
        idx_map = lambda i: (0,) * ndim
        if single_buffer_weights:
            # Weights never change across the grid: drop the second pipeline buffer.
            return pl.BlockSpec(a.shape, idx_map, pipeline_mode=pl.Buffered(1))
        return pl.BlockSpec(a.shape, idx_map)

    in_specs = [pl.BlockSpec((batch_tile, S, D), lambda i: (i, 0, 0))]
    in_specs += [_invariant_spec(a) for a in weight_args]

    kernel = partial(_encoder_layer_kernel, d_h=d_h, fuse_qkv=fuse_qkv, cdt=cdt)

    cp_kwargs = dict(dimension_semantics=("parallel",))
    if vmem_cap:
        cp_kwargs["vmem_limit_bytes"] = int(0.9 * vmem_cap)

    return pl.pallas_call(
        kernel,
        out_shape=jax.ShapeDtypeStruct((B, S, D), x.dtype),
        grid_spec=pltpu.PrefetchScalarGridSpec(
            num_scalar_prefetch=0,
            grid=(B // batch_tile,),
            in_specs=in_specs,
            out_specs=pl.BlockSpec((batch_tile, S, D), lambda i: (i, 0, 0)),
        ),
        compiler_params=pltpu.CompilerParams(**cp_kwargs),
    )(x, *weight_args)


def _reference(x, params, num_heads):
    # Pure-JAX mirror of the PyTorch module (unfused), to validate the folding.
    (wq, wk, wv, wmq, bmq, wmk, bmk, wmv, bmv,
     wo, w1, w2, ln0_w, ln0_b, ln1_w, ln1_b) = params
    q = x @ wq
    k = x @ wk
    v = x @ wv
    nq = q @ wmq + bmq
    nk = k @ wmk + bmk
    nv = v @ wmv + bmv
    d_h = nk.shape[-1]
    s = jnp.einsum("bqd,bkd->bqk", nq, nk) / math.sqrt(d_h)
    p = jax.nn.softmax(s, axis=-1)
    head = jnp.einsum("bqk,bkd->bqd", p, nv)
    mh = jnp.concatenate([head] * num_heads, axis=-1) @ wo

    def ln(z, w, b, eps=1e-5):
        m = jnp.mean(z, -1, keepdims=True)
        var = jnp.mean((z - m) ** 2, -1, keepdims=True)
        return (z - m) / jnp.sqrt(var + eps) * w + b

    h = ln(x + mh, ln0_w, ln0_b)
    ff = jnp.maximum(h @ w1, 0.0) @ w2
    return ln(ff + h, ln1_w, ln1_b)


if __name__ == "__main__":
    B, S, D = 2, 8, 32
    num_heads = 4
    middle_dim = 64
    d_h = D // num_heads

    key = jax.random.PRNGKey(0)
    ks = jax.random.split(key, 12)
    scale = 0.1

    x = jax.random.normal(ks[0], (B, S, D), jnp.float32)

    # All linear weights stored as (in_features, out_features) = W^T of PyTorch.
    wq = scale * jax.random.normal(ks[1], (D, D), jnp.float32)
    wk = scale * jax.random.normal(ks[2], (D, D), jnp.float32)
    wv = scale * jax.random.normal(ks[3], (D, D), jnp.float32)
    wmq = scale * jax.random.normal(ks[4], (D, d_h), jnp.float32)
    bmq = scale * jax.random.normal(ks[5], (1, d_h), jnp.float32)
    wmk = scale * jax.random.normal(ks[6], (D, d_h), jnp.float32)
    bmk = scale * jax.random.normal(ks[7], (1, d_h), jnp.float32)
    wmv = scale * jax.random.normal(ks[8], (D, d_h), jnp.float32)
    bmv = scale * jax.random.normal(ks[9], (1, d_h), jnp.float32)
    wo = scale * jax.random.normal(ks[10], (D, D), jnp.float32)
    w1 = scale * jax.random.normal(ks[11], (D, middle_dim), jnp.float32)
    w2 = scale * jax.random.normal(jax.random.fold_in(key, 99), (middle_dim, D), jnp.float32)
    ln0_w = jnp.ones((1, D), jnp.float32)
    ln0_b = jnp.zeros((1, D), jnp.float32)
    ln1_w = jnp.ones((1, D), jnp.float32)
    ln1_b = jnp.zeros((1, D), jnp.float32)

    params = (wq, wk, wv, wmq, bmq, wmk, bmk, wmv, bmv,
              wo, w1, w2, ln0_w, ln0_b, ln1_w, ln1_b)

    ref = _reference(x, params, num_heads)

    # 1) precision path: f32 MXU operands, exact softmax reciprocal.
    out_f32 = encoder_layer(x, params, num_heads=num_heads, compute_dtype=jnp.float32)
    out_f32 = jax.block_until_ready(out_f32)
    assert out_f32.shape == (B, S, D)
    assert jnp.allclose(out_f32, ref, atol=1e-3, rtol=1e-3), \
        float(jnp.max(jnp.abs(out_f32 - ref)))

    # 2) fast path (default): bf16 MXU operands, f32 accumulation / statistics,
    #    EUP approximate reciprocal. Looser tolerance covers bf16 operand rounding.
    out_fast = encoder_layer(x, params, num_heads=num_heads)
    out_fast = jax.block_until_ready(out_fast)
    assert out_fast.shape == (B, S, D)
    assert jnp.allclose(out_fast, ref, atol=3e-2, rtol=3e-2), \
        float(jnp.max(jnp.abs(out_fast - ref)))

    print("KERNEL_OK")
</pallas_src>

<mosaic_0001>
module attributes {stable_mosaic.version = 11 : i64} {
  func.func @_encoder_layer_kernel(%arg0: i32, %arg1: memref<2x8x32xf32, #tpu.memory_space<vmem>>, %arg2: memref<32x8xf32, #tpu.memory_space<vmem>>, %arg3: memref<1x8xf32, #tpu.memory_space<vmem>>, %arg4: memref<32x8xf32, #tpu.memory_space<vmem>>, %arg5: memref<1x8xf32, #tpu.memory_space<vmem>>, %arg6: memref<32x8xf32, #tpu.memory_space<vmem>>, %arg7: memref<1x8xf32, #tpu.memory_space<vmem>>, %arg8: memref<8x32xf32, #tpu.memory_space<vmem>>, %arg9: memref<32x64xf32, #tpu.memory_space<vmem>>, %arg10: memref<64x32xf32, #tpu.memory_space<vmem>>, %arg11: memref<1x32xf32, #tpu.memory_space<vmem>>, %arg12: memref<1x32xf32, #tpu.memory_space<vmem>>, %arg13: memref<1x32xf32, #tpu.memory_space<vmem>>, %arg14: memref<1x32xf32, #tpu.memory_space<vmem>>, %arg15: memref<2x8x32xf32, #tpu.memory_space<vmem>>) attributes {dimension_semantics = [#tpu.dimension_semantics<parallel>], iteration_bounds = array<i64: 1>, scalar_prefetch = 0 : i64, scratch_operands = 0 : i64, tpu.core_type = #tpu.core_type<tc>, window_params = [{transform_indices = @transform_0, window_bounds = array<i64: 2, 8, 32>}, {pipeline_mode = #tpu.pipeline_mode<synchronous>, transform_indices = @transform_1, window_bounds = array<i64: 32, 8>}, {pipeline_mode = #tpu.pipeline_mode<synchronous>, transform_indices = @transform_2, window_bounds = array<i64: 1, 8>}, {pipeline_mode = #tpu.pipeline_mode<synchronous>, transform_indices = @transform_3, window_bounds = array<i64: 32, 8>}, {pipeline_mode = #tpu.pipeline_mode<synchronous>, transform_indices = @transform_4, window_bounds = array<i64: 1, 8>}, {pipeline_mode = #tpu.pipeline_mode<synchronous>, transform_indices = @transform_5, window_bounds = array<i64: 32, 8>}, {pipeline_mode = #tpu.pipeline_mode<synchronous>, transform_indices = @transform_6, window_bounds = array<i64: 1, 8>}, {pipeline_mode = #tpu.pipeline_mode<synchronous>, transform_indices = @transform_7, window_bounds = array<i64: 8, 32>}, {pipeline_mode = #tpu.pipeline_mode<synchronous>, transform_indices = @transform_8, window_bounds = array<i64: 32, 64>}, {pipeline_mode = #tpu.pipeline_mode<synchronous>, transform_indices = @transform_9, window_bounds = array<i64: 64, 32>}, {pipeline_mode = #tpu.pipeline_mode<synchronous>, transform_indices = @transform_10, window_bounds = array<i64: 1, 32>}, {pipeline_mode = #tpu.pipeline_mode<synchronous>, transform_indices = @transform_11, window_bounds = array<i64: 1, 32>}, {pipeline_mode = #tpu.pipeline_mode<synchronous>, transform_indices = @transform_12, window_bounds = array<i64: 1, 32>}, {pipeline_mode = #tpu.pipeline_mode<synchronous>, transform_indices = @transform_13, window_bounds = array<i64: 1, 32>}, {transform_indices = @transform_14, window_bounds = array<i64: 2, 8, 32>}]} {
    %c0 = arith.constant 0 : index
    %c0_0 = arith.constant 0 : index
    %c0_1 = arith.constant 0 : index
    %0 = vector.load %arg1[%c0, %c0_0, %c0_1] : memref<2x8x32xf32, #tpu.memory_space<vmem>>, vector<2x8x32xf32>
    %1 = vector.shape_cast %0 : vector<2x8x32xf32> to vector<16x32xf32>
    %c0_2 = arith.constant 0 : index
    %c0_3 = arith.constant 0 : index
    %2 = vector.load %arg2[%c0_2, %c0_3] : memref<32x8xf32, #tpu.memory_space<vmem>>, vector<32x8xf32>
    %cst = arith.constant dense<0.000000e+00> : vector<16x8xf32>
    %3 = tpu.matmul %1, %2, %cst {dimension_numbers = #tpu.dot_dimension_numbers<[1], [0], [0], [1], [0, 0, 1, 1], [], []>} : vector<16x32xf32>, vector<32x8xf32>, vector<16x8xf32> -> vector<16x8xf32>
    %c0_4 = arith.constant 0 : index
    %c0_5 = arith.constant 0 : index
    %4 = vector.load %arg3[%c0_4, %c0_5] : memref<1x8xf32, #tpu.memory_space<vmem>>, vector<1x8xf32>
    %5 = vector.broadcast %4 : vector<1x8xf32> to vector<16x8xf32>
    %6 = arith.addf %3, %5 : vector<16x8xf32>
    %c0_6 = arith.constant 0 : index
    %c0_7 = arith.constant 0 : index
    %7 = vector.load %arg4[%c0_6, %c0_7] : memref<32x8xf32, #tpu.memory_space<vmem>>, vector<32x8xf32>
    %cst_8 = arith.constant dense<0.000000e+00> : vector<16x8xf32>
    %8 = tpu.matmul %1, %7, %cst_8 {dimension_numbers = #tpu.dot_dimension_numbers<[1], [0], [0], [1], [0, 0, 1, 1], [], []>} : vector<16x32xf32>, vector<32x8xf32>, vector<16x8xf32> -> vector<16x8xf32>
    %c0_9 = arith.constant 0 : index
    %c0_10 = arith.constant 0 : index
    %9 = vector.load %arg5[%c0_9, %c0_10] : memref<1x8xf32, #tpu.memory_space<vmem>>, vector<1x8xf32>
    %10 = vector.broadcast %9 : vector<1x8xf32> to vector<16x8xf32>
    %11 = arith.addf %8, %10 : vector<16x8xf32>
    %c0_11 = arith.constant 0 : index
    %c0_12 = arith.constant 0 : index
    %12 = vector.load %arg6[%c0_11, %c0_12] : memref<32x8xf32, #tpu.memory_space<vmem>>, vector<32x8xf32>
    %cst_13 = arith.constant dense<0.000000e+00> : vector<16x8xf32>
    %13 = tpu.matmul %1, %12, %cst_13 {dimension_numbers = #tpu.dot_dimension_numbers<[1], [0], [0], [1], [0, 0, 1, 1], [], []>} : vector<16x32xf32>, vector<32x8xf32>, vector<16x8xf32> -> vector<16x8xf32>
    %c0_14 = arith.constant 0 : index
    %c0_15 = arith.constant 0 : index
    %14 = vector.load %arg7[%c0_14, %c0_15] : memref<1x8xf32, #tpu.memory_space<vmem>>, vector<1x8xf32>
    %15 = vector.broadcast %14 : vector<1x8xf32> to vector<16x8xf32>
    %16 = arith.addf %13, %15 : vector<16x8xf32>
    %17 = vector.shape_cast %6 : vector<16x8xf32> to vector<2x8x8xf32>
    %18 = vector.shape_cast %11 : vector<16x8xf32> to vector<2x8x8xf32>
    %19 = vector.shape_cast %16 : vector<16x8xf32> to vector<2x8x8xf32>
    %cst_16 = arith.constant dense<0.000000e+00> : vector<2x8x8xf32>
    %20 = tpu.matmul %17, %18, %cst_16 {dimension_numbers = #tpu.dot_dimension_numbers<[2], [2], [1], [1], [0, 0, 0, 1, 1, 1], [0], [0]>} : vector<2x8x8xf32>, vector<2x8x8xf32>, vector<2x8x8xf32> -> vector<2x8x8xf32>
    %cst_17 = arith.constant dense<0xFF800000> : vector<2x8xf32>
    %21 = vector.multi_reduction <maximumf>, %20, %cst_17 [2] : vector<2x8x8xf32> to vector<2x8xf32>
    %22 = vector.shape_cast %21 : vector<2x8xf32> to vector<2x8x1xf32>
    %23 = vector.broadcast %22 : vector<2x8x1xf32> to vector<2x8x8xf32>
    %24 = arith.subf %20, %23 : vector<2x8x8xf32>
    %25 = math.exp %24 : vector<2x8x8xf32>
    %cst_18 = arith.constant dense<0.000000e+00> : vector<2x8xf32>
    %26 = vector.multi_reduction <add>, %25, %cst_18 [2] : vector<2x8x8xf32> to vector<2x8xf32>
    %27 = vector.shape_cast %26 : vector<2x8xf32> to vector<2x8x1xf32>
    %28 = tpu.reciprocal %27 : vector<2x8x1xf32> -> vector<2x8x1xf32>
    %cst_19 = arith.constant dense<0.000000e+00> : vector<2x8x8xf32>
    %29 = tpu.matmul %25, %19, %cst_19 {dimension_numbers = #tpu.dot_dimension_numbers<[2], [1], [1], [2], [0, 0, 0, 1, 1, 2], [0], [0]>} : vector<2x8x8xf32>, vector<2x8x8xf32>, vector<2x8x8xf32> -> vector<2x8x8xf32>
    %30 = vector.broadcast %28 : vector<2x8x1xf32> to vector<2x8x8xf32>
    %31 = arith.mulf %29, %30 : vector<2x8x8xf32>
    %32 = vector.shape_cast %31 : vector<2x8x8xf32> to vector<16x8xf32>
    %c0_20 = arith.constant 0 : index
    %c0_21 = arith.constant 0 : index
    %33 = vector.load %arg8[%c0_20, %c0_21] : memref<8x32xf32, #tpu.memory_space<vmem>>, vector<8x32xf32>
    %cst_22 = arith.constant dense<0.000000e+00> : vector<16x32xf32>
    %34 = tpu.matmul %32, %33, %cst_22 {dimension_numbers = #tpu.dot_dimension_numbers<[1], [0], [0], [1], [0, 0, 1, 1], [], []>} : vector<16x8xf32>, vector<8x32xf32>, vector<16x32xf32> -> vector<16x32xf32>
    %35 = arith.addf %1, %34 : vector<16x32xf32>
    %c0_23 = arith.constant 0 : index
    %c0_24 = arith.constant 0 : index
    %36 = vector.load %arg11[%c0_23, %c0_24] : memref<1x32xf32, #tpu.memory_space<vmem>>, vector<1x32xf32>
    %c0_25 = arith.constant 0 : index
    %c0_26 = arith.constant 0 : index
    %37 = vector.load %arg12[%c0_25, %c0_26] : memref<1x32xf32, #tpu.memory_space<vmem>>, vector<1x32xf32>
    %cst_27 = arith.constant dense<0.000000e+00> : vector<16xf32>
    %38 = vector.multi_reduction <add>, %35, %cst_27 [1] : vector<16x32xf32> to vector<16xf32>
    %39 = vector.shape_cast %38 : vector<16xf32> to vector<16x1xf32>
    %cst_28 = arith.constant 3.200000e+01 : f32
    %40 = vector.broadcast %cst_28 : f32 to vector<16x1xf32>
    %41 = arith.divf %39, %40 : vector<16x1xf32>
    %42 = vector.broadcast %41 : vector<16x1xf32> to vector<16x32xf32>
    %43 = arith.subf %35, %42 : vector<16x32xf32>
    %44 = arith.mulf %43, %43 : vector<16x32xf32>
    %cst_29 = arith.constant dense<0.000000e+00> : vector<16xf32>
    %45 = vector.multi_reduction <add>, %44, %cst_29 [1] : vector<16x32xf32> to vector<16xf32>
    %46 = vector.shape_cast %45 : vector<16xf32> to vector<16x1xf32>
    %cst_30 = arith.constant 3.200000e+01 : f32
    %47 = vector.broadcast %cst_30 : f32 to vector<16x1xf32>
    %48 = arith.divf %46, %47 : vector<16x1xf32>
    %49 = vector.broadcast %41 : vector<16x1xf32> to vector<16x32xf32>
    %50 = arith.subf %35, %49 : vector<16x32xf32>
    %cst_31 = arith.constant 9.99999974E-6 : f32
    %51 = vector.broadcast %cst_31 : f32 to vector<16x1xf32>
    %52 = arith.addf %48, %51 : vector<16x1xf32>
    %53 = math.rsqrt %52 : vector<16x1xf32>
    %54 = vector.broadcast %53 : vector<16x1xf32> to vector<16x32xf32>
    %55 = arith.mulf %50, %54 : vector<16x32xf32>
    %56 = vector.broadcast %36 : vector<1x32xf32> to vector<16x32xf32>
    %57 = arith.mulf %55, %56 : vector<16x32xf32>
    %58 = vector.broadcast %37 : vector<1x32xf32> to vector<16x32xf32>
    %59 = arith.addf %57, %58 : vector<16x32xf32>
    %c0_32 = arith.constant 0 : index
    %c0_33 = arith.constant 0 : index
    %60 = vector.load %arg9[%c0_32, %c0_33] : memref<32x64xf32, #tpu.memory_space<vmem>>, vector<32x64xf32>
    %cst_34 = arith.constant dense<0.000000e+00> : vector<16x64xf32>
    %61 = tpu.matmul %59, %60, %cst_34 {dimension_numbers = #tpu.dot_dimension_numbers<[1], [0], [0], [1], [0, 0, 1, 1], [], []>} : vector<16x32xf32>, vector<32x64xf32>, vector<16x64xf32> -> vector<16x64xf32>
    %cst_35 = arith.constant 0.000000e+00 : f32
    %62 = vector.broadcast %cst_35 : f32 to vector<16x64xf32>
    %63 = arith.maximumf %61, %62 : vector<16x64xf32>
    %c0_36 = arith.constant 0 : index
    %c0_37 = arith.constant 0 : index
    %64 = vector.load %arg10[%c0_36, %c0_37] : memref<64x32xf32, #tpu.memory_space<vmem>>, vector<64x32xf32>
    %cst_38 = arith.constant dense<0.000000e+00> : vector<16x32xf32>
    %65 = tpu.matmul %63, %64, %cst_38 {dimension_numbers = #tpu.dot_dimension_numbers<[1], [0], [0], [1], [0, 0, 1, 1], [], []>} : vector<16x64xf32>, vector<64x32xf32>, vector<16x32xf32> -> vector<16x32xf32>
    %66 = arith.addf %65, %59 : vector<16x32xf32>
    %c0_39 = arith.constant 0 : index
    %c0_40 = arith.constant 0 : index
    %67 = vector.load %arg13[%c0_39, %c0_40] : memref<1x32xf32, #tpu.memory_space<vmem>>, vector<1x32xf32>
    %c0_41 = arith.constant 0 : index
    %c0_42 = arith.constant 0 : index
    %68 = vector.load %arg14[%c0_41, %c0_42] : memref<1x32xf32, #tpu.memory_space<vmem>>, vector<1x32xf32>
    %cst_43 = arith.constant dense<0.000000e+00> : vector<16xf32>
    %69 = vector.multi_reduction <add>, %66, %cst_43 [1] : vector<16x32xf32> to vector<16xf32>
    %70 = vector.shape_cast %69 : vector<16xf32> to vector<16x1xf32>
    %cst_44 = arith.constant 3.200000e+01 : f32
    %71 = vector.broadcast %cst_44 : f32 to vector<16x1xf32>
    %72 = arith.divf %70, %71 : vector<16x1xf32>
    %73 = vector.broadcast %72 : vector<16x1xf32> to vector<16x32xf32>
    %74 = arith.subf %66, %73 : vector<16x32xf32>
    %75 = arith.mulf %74, %74 : vector<16x32xf32>
    %cst_45 = arith.constant dense<0.000000e+00> : vector<16xf32>
    %76 = vector.multi_reduction <add>, %75, %cst_45 [1] : vector<16x32xf32> to vector<16xf32>
    %77 = vector.shape_cast %76 : vector<16xf32> to vector<16x1xf32>
    %cst_46 = arith.constant 3.200000e+01 : f32
    %78 = vector.broadcast %cst_46 : f32 to vector<16x1xf32>
    %79 = arith.divf %77, %78 : vector<16x1xf32>
    %80 = vector.broadcast %72 : vector<16x1xf32> to vector<16x32xf32>
    %81 = arith.subf %66, %80 : vector<16x32xf32>
    %cst_47 = arith.constant 9.99999974E-6 : f32
    %82 = vector.broadcast %cst_47 : f32 to vector<16x1xf32>
    %83 = arith.addf %79, %82 : vector<16x1xf32>
    %84 = math.rsqrt %83 : vector<16x1xf32>
    %85 = vector.broadcast %84 : vector<16x1xf32> to vector<16x32xf32>
    %86 = arith.mulf %81, %85 : vector<16x32xf32>
    %87 = vector.broadcast %67 : vector<1x32xf32> to vector<16x32xf32>
    %88 = arith.mulf %86, %87 : vector<16x32xf32>
    %89 = vector.broadcast %68 : vector<1x32xf32> to vector<16x32xf32>
    %90 = arith.addf %88, %89 : vector<16x32xf32>
    %91 = vector.shape_cast %90 : vector<16x32xf32> to vector<2x8x32xf32>
    %c0_48 = arith.constant 0 : index
    %c0_49 = arith.constant 0 : index
    %c0_50 = arith.constant 0 : index
    %92 = vector.load %arg15[%c0_48, %c0_49, %c0_50] : memref<2x8x32xf32, #tpu.memory_space<vmem>>, vector<2x8x32xf32>
    tpu.vector_store %arg15[%c0_48, %c0_49, %c0_50], %91 {strides = array<i32>} : memref<2x8x32xf32, #tpu.memory_space<vmem>>, vector<2x8x32xf32>,
    return
  }
  func.func @transform_0(%arg0: i32) -> (i32, i32, i32) {
    %c0_i32 = arith.constant 0 : i32
    %c0_i32_0 = arith.constant 0 : i32
    %c0_i32_1 = arith.constant 0 : i32
    return %arg0, %c0_i32, %c0_i32_0 : i32, i32, i32
  }
  func.func @transform_1(%arg0: i32) -> (i32, i32) {
    %c0_i32 = arith.constant 0 : i32
    %c0_i32_0 = arith.constant 0 : i32
    %c0_i32_1 = arith.constant 0 : i32
    return %c0_i32, %c0_i32_0 : i32, i32
  }
  func.func @transform_2(%arg0: i32) -> (i32, i32) {
    %c0_i32 = arith.constant 0 : i32
    %c0_i32_0 = arith.constant 0 : i32
    %c0_i32_1 = arith.constant 0 : i32
    return %c0_i32, %c0_i32_0 : i32, i32
  }
  func.func @transform_3(%arg0: i32) -> (i32, i32) {
    %c0_i32 = arith.constant 0 : i32
    %c0_i32_0 = arith.constant 0 : i32
    %c0_i32_1 = arith.constant 0 : i32
    return %c0_i32, %c0_i32_0 : i32, i32
  }
  func.func @transform_4(%arg0: i32) -> (i32, i32) {
    %c0_i32 = arith.constant 0 : i32
    %c0_i32_0 = arith.constant 0 : i32
    %c0_i32_1 = arith.constant 0 : i32
    return %c0_i32, %c0_i32_0 : i32, i32
  }
  func.func @transform_5(%arg0: i32) -> (i32, i32) {
    %c0_i32 = arith.constant 0 : i32
    %c0_i32_0 = arith.constant 0 : i32
    %c0_i32_1 = arith.constant 0 : i32
    return %c0_i32, %c0_i32_0 : i32, i32
  }
  func.func @transform_6(%arg0: i32) -> (i32, i32) {
    %c0_i32 = arith.constant 0 : i32
    %c0_i32_0 = arith.constant 0 : i32
    %c0_i32_1 = arith.constant 0 : i32
    return %c0_i32, %c0_i32_0 : i32, i32
  }
  func.func @transform_7(%arg0: i32) -> (i32, i32) {
    %c0_i32 = arith.constant 0 : i32
    %c0_i32_0 = arith.constant 0 : i32
    %c0_i32_1 = arith.constant 0 : i32
    return %c0_i32, %c0_i32_0 : i32, i32
  }
  func.func @transform_8(%arg0: i32) -> (i32, i32) {
    %c0_i32 = arith.constant 0 : i32
    %c0_i32_0 = arith.constant 0 : i32
    %c0_i32_1 = arith.constant 0 : i32
    return %c0_i32, %c0_i32_0 : i32, i32
  }
  func.func @transform_9(%arg0: i32) -> (i32, i32) {
    %c0_i32 = arith.constant 0 : i32
    %c0_i32_0 = arith.constant 0 : i32
    %c0_i32_1 = arith.constant 0 : i32
    return %c0_i32, %c0_i32_0 : i32, i32
  }
  func.func @transform_10(%arg0: i32) -> (i32, i32) {
    %c0_i32 = arith.constant 0 : i32
    %c0_i32_0 = arith.constant 0 : i32
    %c0_i32_1 = arith.constant 0 : i32
    return %c0_i32, %c0_i32_0 : i32, i32
  }
  func.func @transform_11(%arg0: i32) -> (i32, i32) {
    %c0_i32 = arith.constant 0 : i32
    %c0_i32_0 = arith.constant 0 : i32
    %c0_i32_1 = arith.constant 0 : i32
    return %c0_i32, %c0_i32_0 : i32, i32
  }
  func.func @transform_12(%arg0: i32) -> (i32, i32) {
    %c0_i32 = arith.constant 0 : i32
    %c0_i32_0 = arith.constant 0 : i32
    %c0_i32_1 = arith.constant 0 : i32
    return %c0_i32, %c0_i32_0 : i32, i32
  }
  func.func @transform_13(%arg0: i32) -> (i32, i32) {
    %c0_i32 = arith.constant 0 : i32
    %c0_i32_0 = arith.constant 0 : i32
    %c0_i32_1 = arith.constant 0 : i32
    return %c0_i32, %c0_i32_0 : i32, i32
  }
  func.func @transform_14(%arg0: i32) -> (i32, i32, i32) {
    %c0_i32 = arith.constant 0 : i32
    %c0_i32_0 = arith.constant 0 : i32
    %c0_i32_1 = arith.constant 0 : i32
    return %arg0, %c0_i32, %c0_i32_0 : i32, i32, i32
  }
}

</mosaic_0001>

<llo_original>
// kernel: tpu_custom_call.1
$region0: #{tpu_custom_call.1}
  #allocation0 [shape = 'u32[]', space=smem, size = 0x4, offset = 0x4, fixed_abs, tag = 'smem constant byte address 0x4 - core index']
  #allocation1 [shape = 'u32[72,128]{1,0:T(1,128)}', space=vmem, size = 0x9000, scoped, tag = 'internal scratch']
  %s0 = inlined_call_operand.vmem [shape: f32[2,8,32], index: 0, kind: input, shape index: {}]
  %s1 = inlined_call_operand.vmem [shape: f32[32,8], index: 1, kind: input, shape index: {}]
  %s2 = inlined_call_operand.vmem [shape: f32[1,8], index: 2, kind: input, shape index: {}]
  %s3 = inlined_call_operand.vmem [shape: f32[32,8], index: 3, kind: input, shape index: {}]
  %s4 = inlined_call_operand.vmem [shape: f32[1,8], index: 4, kind: input, shape index: {}]
  %s5 = inlined_call_operand.vmem [shape: f32[32,8], index: 5, kind: input, shape index: {}]
  %s6 = inlined_call_operand.vmem [shape: f32[1,8], index: 6, kind: input, shape index: {}]
  %s7 = inlined_call_operand.vmem [shape: f32[8,32], index: 7, kind: input, shape index: {}]
  %s8 = inlined_call_operand.vmem [shape: f32[32,64], index: 8, kind: input, shape index: {}]
  %s9 = inlined_call_operand.vmem [shape: f32[64,32], index: 9, kind: input, shape index: {}]
  %s10 = inlined_call_operand.vmem [shape: f32[1,32], index: 10, kind: input, shape index: {}]
  %s11 = inlined_call_operand.vmem [shape: f32[1,32], index: 11, kind: input, shape index: {}]
  %s12 = inlined_call_operand.vmem [shape: f32[1,32], index: 12, kind: input, shape index: {}]
  %s13 = inlined_call_operand.vmem [shape: f32[1,32], index: 13, kind: input, shape index: {}]
  %s14 = inlined_call_operand.hbm [shape: f32[2,8,32], index: 14, kind: output, shape index: {}]
  %s15 = sld [smem:[#allocation0]]
  $region66: #{tpu_custom_call.1} parent=0
    _
  %s17 = ssub.s32 1, %s15
  %s18 = scalar_select 0, %s17, %s15
  $region1: #{tpu_custom_call.1} parent=0
    #allocation2 [shape = 'u8[8192]{0}', space=vmem, size = 0x2000, scoped, tag = 'output window, operand 0, single buffered']
    #allocation3 [shape = 's32[1]{0}', space=sflag, size = 0x4, scoped, tag = 'scoped memory for tpu_custom_call.1']
    %19 = vsyncpa [#allocation3], 0
    // Predicated region
    $region2: #{tpu_custom_call.1} parent=1 // pred_check
      _
    $region3: #{tpu_custom_call.1} parent=1 // pred_check_branch
      %21 = sbr.rel (0) target = $region5
    $region4: #{tpu_custom_call.1} parent=1 // pred_region
      _
    $region5: #{tpu_custom_call.1} parent=1 // pred_fallthru
      _
    // Predicated region
    $region6: #{tpu_custom_call.1} parent=1 // pred_check
      _
    $region7: #{tpu_custom_call.1} parent=1 // pred_check_branch
      %23 = sbr.rel (0) target = $region9
    $region8: #{tpu_custom_call.1} parent=1 // pred_region
      _
    $region9: #{tpu_custom_call.1} parent=1 // pred_fallthru
      _
    // Predicated region
    $region10: #{tpu_custom_call.1} parent=1 // pred_check
      _
    $region11: #{tpu_custom_call.1} parent=1 // pred_check_branch
      %25 = sbr.rel (0) target = $region13
    $region12: #{tpu_custom_call.1} parent=1 // pred_region
      _
    $region13: #{tpu_custom_call.1} parent=1 // pred_fallthru
      _
    // Predicated region
    $region14: #{tpu_custom_call.1} parent=1 // pred_check
      _
    $region15: #{tpu_custom_call.1} parent=1 // pred_check_branch
      %27 = sbr.rel (0) target = $region17
    $region16: #{tpu_custom_call.1} parent=1 // pred_region
      _
    $region17: #{tpu_custom_call.1} parent=1 // pred_fallthru
      _
    // Predicated region
    $region18: #{tpu_custom_call.1} parent=1 // pred_check
      _
    $region19: #{tpu_custom_call.1} parent=1 // pred_check_branch
      %29 = sbr.rel (0) target = $region21
    $region20: #{tpu_custom_call.1} parent=1 // pred_region
      _
    $region21: #{tpu_custom_call.1} parent=1 // pred_fallthru
      _
    // Predicated region
    $region22: #{tpu_custom_call.1} parent=1 // pred_check
      _
    $region23: #{tpu_custom_call.1} parent=1 // pred_check_branch
      %31 = sbr.rel (0) target = $region25
    $region24: #{tpu_custom_call.1} parent=1 // pred_region
      _
    $region25: #{tpu_custom_call.1} parent=1 // pred_fallthru
      _
    // Predicated region
    $region26: #{tpu_custom_call.1} parent=1 // pred_check
      _
    $region27: #{tpu_custom_call.1} parent=1 // pred_check_branch
      %33 = sbr.rel (0) target = $region29
    $region28: #{tpu_custom_call.1} parent=1 // pred_region
      _
    $region29: #{tpu_custom_call.1} parent=1 // pred_fallthru
      _
    // Predicated region
    $region30: #{tpu_custom_call.1} parent=1 // pred_check
      _
    $region31: #{tpu_custom_call.1} parent=1 // pred_check_branch
      %35 = sbr.rel (0) target = $region33
    $region32: #{tpu_custom_call.1} parent=1 // pred_region
      _
    $region33: #{tpu_custom_call.1} parent=1 // pred_fallthru
      _
    // Predicated region
    $region34: #{tpu_custom_call.1} parent=1 // pred_check
      _
    $region35: #{tpu_custom_call.1} parent=1 // pred_check_branch
      %37 = sbr.rel (0) target = $region37
    $region36: #{tpu_custom_call.1} parent=1 // pred_region
      _
    $region37: #{tpu_custom_call.1} parent=1 // pred_fallthru
      _
    // Predicated region
    $region38: #{tpu_custom_call.1} parent=1 // pred_check
      _
    $region39: #{tpu_custom_call.1} parent=1 // pred_check_branch
      %39 = sbr.rel (0) target = $region41
    $region40: #{tpu_custom_call.1} parent=1 // pred_region
      _
    $region41: #{tpu_custom_call.1} parent=1 // pred_fallthru
      _
    // Predicated region
    $region42: #{tpu_custom_call.1} parent=1 // pred_check
      _
    $region43: #{tpu_custom_call.1} parent=1 // pred_check_branch
      %41 = sbr.rel (0) target = $region45
    $region44: #{tpu_custom_call.1} parent=1 // pred_region
      _
    $region45: #{tpu_custom_call.1} parent=1 // pred_fallthru
      _
    // Predicated region
    $region46: #{tpu_custom_call.1} parent=1 // pred_check
      _
    $region47: #{tpu_custom_call.1} parent=1 // pred_check_branch
      %43 = sbr.rel (0) target = $region49
    $region48: #{tpu_custom_call.1} parent=1 // pred_region
      _
    $region49: #{tpu_custom_call.1} parent=1 // pred_fallthru
      _
    // Predicated region
    $region50: #{tpu_custom_call.1} parent=1 // pred_check
      _
    $region51: #{tpu_custom_call.1} parent=1 // pred_check_branch
      %45 = sbr.rel (0) target = $region53
    $region52: #{tpu_custom_call.1} parent=1 // pred_region
      _
    $region53: #{tpu_custom_call.1} parent=1 // pred_fallthru
      _
    // Predicated region
    $region54: #{tpu_custom_call.1} parent=1 // pred_check
      _
    $region55: #{tpu_custom_call.1} parent=1 // pred_check_branch
      %47 = sbr.rel (0) target = $region57
    $region56: #{tpu_custom_call.1} parent=1 // pred_region
      _
    $region57: #{tpu_custom_call.1} parent=1 // pred_fallthru
      _
    %v48 = vld [vmem:[%s0] sm:$0xff]
    %v49 = vld [vmem:[%s0 + $0x8] sm:$0xff]
    %v50 = vld [vmem:[%s1] sm:$0xff]
    %v51 = vld [vmem:[%s1 + $0x8] sm:$0xff]
    %v52 = vld [vmem:[%s1 + $0x10] sm:$0xff]
    %v53 = vld [vmem:[%s1 + $0x18] sm:$0xff]
    %v54 = vld [vmem:[%s2] sm:$0x1]
    %v56 = vperm.slane %v54, 0
    %vm58 = vcmask 261120
    %v60 = vsel %vm58, %v48, 0
    %v63 = vsel %vm58, %v49, 0
    %65 = vmatpush.msra.mxu0 0.0
    %66 = vmatpush.msra.mxu0 0.0
    %67 = vmatpush.msra.mxu0 0.0
    %68 = vmatpush.msra.mxu0 0.0
    %69 = vmatpush.msra.mxu0 0.0
    %70 = vmatpush.msra.mxu0 0.0
    %71 = vmatpush.msra.mxu0 0.0
    %72 = vmatpush.msra.mxu0 0.0
    %73 = vmatpush.msra.mxu0 0.0
    %74 = vmatpush.msra.mxu0 0.0
    %75 = vmatpush.msra.mxu0 0.0
    %76 = vmatpush.msra.mxu0 0.0
    %77 = vmatpush.msra.mxu0 %v53
    %78 = vmatpush.msra.mxu0 %v52
    %79 = vmatpush.msra.mxu0 %v51
    %80 = vmatpush.msra.mxu0 %v50
    %81 = vmatmul.f32.gmra.mxu0 %v60
    %v82 = vpop.f32.mrf.mxu0
    %v83 = vadd.f32 %v56, %v82
    %84 = vmatmul.f32.gmra.mxu0 %v63
    %v85 = vpop.f32.mrf.mxu0
    %v86 = vadd.f32 %v56, %v85
    %87 = vdwg.mxu0
    %v88 = vld [vmem:[%s3] sm:$0xff]
    %v89 = vld [vmem:[%s3 + $0x8] sm:$0xff]
    %v90 = vld [vmem:[%s3 + $0x10] sm:$0xff]
    %v91 = vld [vmem:[%s3 + $0x18] sm:$0xff]
    %v92 = vld [vmem:[%s4] sm:$0x1]
    %v94 = vperm.slane %v92, 0
    %96 = vmatpush.msra.mxu0 0.0
    %97 = vmatpush.msra.mxu0 0.0
    %98 = vmatpush.msra.mxu0 0.0
    %99 = vmatpush.msra.mxu0 0.0
    %100 = vmatpush.msra.mxu0 0.0
    %101 = vmatpush.msra.mxu0 0.0
    %102 = vmatpush.msra.mxu0 0.0
    %103 = vmatpush.msra.mxu0 0.0
    %104 = vmatpush.msra.mxu0 0.0
    %105 = vmatpush.msra.mxu0 0.0
    %106 = vmatpush.msra.mxu0 0.0
    %107 = vmatpush.msra.mxu0 0.0
    %108 = vmatpush.msra.mxu0 %v91
    %109 = vmatpush.msra.mxu0 %v90
    %110 = vmatpush.msra.mxu0 %v89
    %111 = vmatpush.msra.mxu0 %v88
    %112 = vmatmul.f32.gmra.mxu0 %v60
    %v113 = vpop.f32.mrf.mxu0
    %v114 = vadd.f32 %v94, %v113
    %115 = vmatmul.f32.gmra.mxu0 %v63
    %v116 = vpop.f32.mrf.mxu0
    %v117 = vadd.f32 %v94, %v116
    %118 = vdwg.mxu0
    %v119 = vld [vmem:[%s5] sm:$0xff]
    %v120 = vld [vmem:[%s5 + $0x8] sm:$0xff]
    %v121 = vld [vmem:[%s5 + $0x10] sm:$0xff]
    %v122 = vld [vmem:[%s5 + $0x18] sm:$0xff]
    %v123 = vld [vmem:[%s6] sm:$0x1]
    %v125 = vperm.slane %v123, 0
    %127 = vmatpush.msra.mxu0 0.0
    %128 = vmatpush.msra.mxu0 0.0
    %129 = vmatpush.msra.mxu0 0.0
    %130 = vmatpush.msra.mxu0 0.0
    %131 = vmatpush.msra.mxu0 0.0
    %132 = vmatpush.msra.mxu0 0.0
    %133 = vmatpush.msra.mxu0 0.0
    %134 = vmatpush.msra.mxu0 0.0
    %135 = vmatpush.msra.mxu0 0.0
    %136 = vmatpush.msra.mxu0 0.0
    %137 = vmatpush.msra.mxu0 0.0
    %138 = vmatpush.msra.mxu0 0.0
    %139 = vmatpush.msra.mxu0 %v122
    %140 = vmatpush.msra.mxu0 %v121
    %141 = vmatpush.msra.mxu0 %v120
    %142 = vmatpush.msra.mxu0 %v119
    %143 = vmatmul.f32.gmra.mxu0 %v60
    %v144 = vpop.f32.mrf.mxu0
    %v145 = vadd.f32 %v125, %v144
    %146 = vmatmul.f32.gmra.mxu0 %v63
    %v147 = vpop.f32.mrf.mxu0
    %v148 = vadd.f32 %v125, %v147
    %149 = vdwg.mxu0
    %vm150 = vcmask 64512
    %v152 = vsel %vm150, %v83, 0
    %v155 = vsel %vm150, %v114, 0
    %157 = vmatpush.xpose.msra.mxu0 0.0
    %158 = vmatpush.xpose.msra.mxu0 0.0
    %159 = vmatpush.xpose.msra.mxu0 0.0
    %160 = vmatpush.xpose.msra.mxu0 0.0
    %161 = vmatpush.xpose.msra.mxu0 0.0
    %162 = vmatpush.xpose.msra.mxu0 0.0
    %163 = vmatpush.xpose.msra.mxu0 0.0
    %164 = vmatpush.xpose.msra.mxu0 0.0
    %165 = vmatpush.xpose.msra.mxu0 0.0
    %166 = vmatpush.xpose.msra.mxu0 0.0
    %167 = vmatpush.xpose.msra.mxu0 0.0
    %168 = vmatpush.xpose.msra.mxu0 0.0
    %169 = vmatpush.xpose.msra.mxu0 0.0
    %170 = vmatpush.xpose.msra.mxu0 0.0
    %171 = vmatpush.xpose.msra.mxu0 0.0
    %172 = vmatpush.xpose.msra.mxu0 %v155
    %173 = vmatmul.f32.gmra.mxu0 %v152
    %v174 = vpop.f32.mrf.mxu0
    %v175 = vadd.f32 0.0, %v174
    %176 = vdwg.mxu0
    %v178 = vsel %vm150, %v86, 0
    %v181 = vsel %vm150, %v117, 0
    %183 = vmatpush.xpose.msra.mxu0 0.0
    %184 = vmatpush.xpose.msra.mxu0 0.0
    %185 = vmatpush.xpose.msra.mxu0 0.0
    %186 = vmatpush.xpose.msra.mxu0 0.0
    %187 = vmatpush.xpose.msra.mxu0 0.0
    %188 = vmatpush.xpose.msra.mxu0 0.0
    %189 = vmatpush.xpose.msra.mxu0 0.0
    %190 = vmatpush.xpose.msra.mxu0 0.0
    %191 = vmatpush.xpose.msra.mxu0 0.0
    %192 = vmatpush.xpose.msra.mxu0 0.0
    %193 = vmatpush.xpose.msra.mxu0 0.0
    %194 = vmatpush.xpose.msra.mxu0 0.0
    %195 = vmatpush.xpose.msra.mxu0 0.0
    %196 = vmatpush.xpose.msra.mxu0 0.0
    %197 = vmatpush.xpose.msra.mxu0 0.0
    %198 = vmatpush.xpose.msra.mxu0 %v181
    %199 = vmatmul.f32.gmra.mxu0 %v178
    %v200 = vpop.f32.mrf.mxu0
    %v201 = vadd.f32 0.0, %v200
    %202 = vdwg.mxu0
    %v203 = vsel %vm150, %v175, -inf
    %204 = vmax.xlane.f32.xlu0 %v203
    %v205 = vpop.xlane.xlu0 %204
    %v206 = vsel %vm150, %v201, -inf
    %207 = vmax.xlane.f32.xlu0 %v206
    %v208 = vpop.xlane.xlu0 %207
    %v209 = vsub.f32 %v175, %v205
    %v210 = vsub.f32 %v201, %v208
    %v211 = vmul.f32 %v209, 1.442695
    %v212 = vpow.pop %v211
    %v213 = vmul.f32 %v210, 1.442695
    %v214 = vpow.pop %v213
    %v215 = vsel %vm150, %v212, 0.0
    %216 = vadd.xlane.f32.xlu0 %v215
    %v217 = vpop.xlane.xlu0 %216
    %v218 = vsel %vm150, %v214, 0.0
    %219 = vadd.xlane.f32.xlu0 %v218
    %v220 = vpop.xlane.xlu0 %219
    %v221 = vrcp.pop %v217
    %v222 = vmul.f32 %v217, %v221
    %v223 = vsub.f32 1.0, %v222
    %v224 = vmul.f32 %v221, %v223
    %v225 = vadd.f32 %v221, %v224
    %vm226 = vweird.f32 %v217
    %vm227 = vweird.f32 %v221
    %vm228 = vmor %vm226, %vm227
    %v229 = vsel %vm228, %v221, %v225
    %v230 = vand.u32 2147483647, %v217
    %vm231 = vcmp.eq.f32.partialorder %v230, 8.507059e+37
    %v232 = vand.u32 %v217, 2147483648
    %v233 = vor.u32 1.1754944e-38, %v232
    %v234 = vsel %vm231, %v233, %v229
    %v235 = vrcp.pop %v220
    %v236 = vmul.f32 %v220, %v235
    %v237 = vsub.f32 1.0, %v236
    %v238 = vmul.f32 %v235, %v237
    %v239 = vadd.f32 %v235, %v238
    %vm240 = vweird.f32 %v220
    %vm241 = vweird.f32 %v235
    %vm242 = vmor %vm240, %vm241
    %v243 = vsel %vm242, %v235, %v239
    %v244 = vand.u32 2147483647, %v220
    %vm245 = vcmp.eq.f32.partialorder %v244, 8.507059e+37
    %v246 = vand.u32 %v220, 2147483648
    %v247 = vor.u32 1.1754944e-38, %v246
    %v248 = vsel %vm245, %v247, %v243
    %v250 = vsel %vm150, %v212, 0
    %252 = vmatpush.msra.mxu0 0.0
    %253 = vmatpush.msra.mxu0 0.0
    %254 = vmatpush.msra.mxu0 0.0
    %255 = vmatpush.msra.mxu0 0.0
    %256 = vmatpush.msra.mxu0 0.0
    %257 = vmatpush.msra.mxu0 0.0
    %258 = vmatpush.msra.mxu0 0.0
    %259 = vmatpush.msra.mxu0 0.0
    %260 = vmatpush.msra.mxu0 0.0
    %261 = vmatpush.msra.mxu0 0.0
    %262 = vmatpush.msra.mxu0 0.0
    %263 = vmatpush.msra.mxu0 0.0
    %264 = vmatpush.msra.mxu0 0.0
    %265 = vmatpush.msra.mxu0 0.0
    %266 = vmatpush.msra.mxu0 0.0
    %267 = vmatpush.msra.mxu0 %v145
    %268 = vmatmul.f32.gmra.mxu0 %v250
    %v269 = vpop.f32.mrf.mxu0
    %v270 = vadd.f32 0.0, %v269
    %271 = vdwg.mxu0
    %v273 = vsel %vm150, %v214, 0
    %275 = vmatpush.msra.mxu0 0.0
    %276 = vmatpush.msra.mxu0 0.0
    %277 = vmatpush.msra.mxu0 0.0
    %278 = vmatpush.msra.mxu0 0.0
    %279 = vmatpush.msra.mxu0 0.0
    %280 = vmatpush.msra.mxu0 0.0
    %281 = vmatpush.msra.mxu0 0.0
    %282 = vmatpush.msra.mxu0 0.0
    %283 = vmatpush.msra.mxu0 0.0
    %284 = vmatpush.msra.mxu0 0.0
    %285 = vmatpush.msra.mxu0 0.0
    %286 = vmatpush.msra.mxu0 0.0
    %287 = vmatpush.msra.mxu0 0.0
    %288 = vmatpush.msra.mxu0 0.0
    %289 = vmatpush.msra.mxu0 0.0
    %290 = vmatpush.msra.mxu0 %v148
    %291 = vmatmul.f32.gmra.mxu0 %v273
    %v292 = vpop.f32.mrf.mxu0
    %v293 = vadd.f32 0.0, %v292
    %294 = vdwg.mxu0
    %v295 = vmul.f32 %v270, %v234
    %v296 = vmul.f32 %v293, %v248
    %v297 = vld [vmem:[%s7] sm:$0xff]
    %v299 = vsel %vm150, %v295, 0
    %v302 = vsel %vm150, %v296, 0
    %304 = vmatpush.msra.mxu0 0.0
    %305 = vmatpush.msra.mxu0 0.0
    %306 = vmatpush.msra.mxu0 0.0
    %307 = vmatpush.msra.mxu0 0.0
    %308 = vmatpush.msra.mxu0 0.0
    %309 = vmatpush.msra.mxu0 0.0
    %310 = vmatpush.msra.mxu0 0.0
    %311 = vmatpush.msra.mxu0 0.0
    %312 = vmatpush.msra.mxu0 0.0
    %313 = vmatpush.msra.mxu0 0.0
    %314 = vmatpush.msra.mxu0 0.0
    %315 = vmatpush.msra.mxu0 0.0
    %316 = vmatpush.msra.mxu0 0.0
    %317 = vmatpush.msra.mxu0 0.0
    %318 = vmatpush.msra.mxu0 0.0
    %319 = vmatpush.msra.mxu0 %v297
    %320 = vmatmul.f32.gmra.mxu0 %v299
    %v321 = vpop.f32.mrf.mxu0
    %v322 = vadd.f32 0.0, %v321
    %323 = vmatmul.f32.gmra.mxu0 %v302
    %v324 = vpop.f32.mrf.mxu0
    %v325 = vadd.f32 0.0, %v324
    %326 = vdwg.mxu0
    %v327 = vadd.f32 %v48, %v322
    %v328 = vadd.f32 %v49, %v325
    %v329 = vld [vmem:[%s10] sm:$0x1]
    %v330 = vld [vmem:[%s11] sm:$0x1]
    %v331 = vsel %vm58, %v327, 0.0
    %332 = vadd.xlane.f32.xlu0 %v331
    %v333 = vpop.xlane.xlu0 %332
    %v334 = vsel %vm58, %v328, 0.0
    %335 = vadd.xlane.f32.xlu0 %v334
    %v336 = vpop.xlane.xlu0 %335
    %v337 = vrcp.pop 32.0
    %v338 = vmul.f32 32.0, %v337
    %v339 = vsub.f32 1.0, %v338
    %v340 = vmul.f32 %v337, %v339
    %v341 = vadd.f32 %v337, %v340
    %vm342 = vweird.f32 %v337
    %v343 = vsel %vm342, %v337, %v341
    %v344 = vmul.f32 %v333, %v343
    %v345 = vmul.f32 %v336, %v343
    %v346 = vsub.f32 %v327, %v344
    %v347 = vsub.f32 %v328, %v345
    %v348 = vmul.f32 %v346, %v346
    %v349 = vmul.f32 %v347, %v347
    %v350 = vsel %vm58, %v348, 0.0
    %351 = vadd.xlane.f32.xlu0 %v350
    %v352 = vpop.xlane.xlu0 %351
    %v353 = vsel %vm58, %v349, 0.0
    %354 = vadd.xlane.f32.xlu0 %v353
    %v355 = vpop.xlane.xlu0 %354
    %v356 = vmul.f32 %v352, %v343
    %v357 = vmul.f32 %v355, %v343
    %v358 = vadd.f32 %v356, 1e-05
    %v359 = vadd.f32 %v357, 1e-05
    %v360 = vrsqrt.pop %v358
    %v361 = vmul.f32 %v360, %v358
    %v362 = vmul.f32 %v361, %v360
    %v363 = vmul.f32 0.5, %v362
    %v364 = vsub.f32 1.5, %v363
    %v365 = vmul.f32 %v360, %v364
    %vm366 = vweird.f32 %v358
    %vm367 = vweird.f32 %v360
    %vm368 = vmor %vm366, %vm367
    %v369 = vsel %vm368, %v360, %v365
    %v370 = vrsqrt.pop %v359
    %v371 = vmul.f32 %v370, %v359
    %v372 = vmul.f32 %v371, %v370
    %v373 = vmul.f32 0.5, %v372
    %v374 = vsub.f32 1.5, %v373
    %v375 = vmul.f32 %v370, %v374
    %vm376 = vweird.f32 %v359
    %vm377 = vweird.f32 %v370
    %vm378 = vmor %vm376, %vm377
    %v379 = vsel %vm378, %v370, %v375
    %v380 = vmul.f32 %v346, %v369
    %v381 = vmul.f32 %v347, %v379
    %v383 = vperm.slane %v329, 0
    %v385 = vmul.f32 %v380, %v383
    %v386 = vmul.f32 %v381, %v383
    %v388 = vperm.slane %v330, 0
    %v390 = vadd.f32 %v385, %v388
    %v391 = vadd.f32 %v386, %v388
    %v392 = vld [vmem:[%s8] sm:$0xff]
    %v393 = vld [vmem:[%s8 + $0x8] sm:$0xff]
    %v394 = vld [vmem:[%s8 + $0x10] sm:$0xff]
    %v395 = vld [vmem:[%s8 + $0x18] sm:$0xff]
    %v397 = vsel %vm58, %v390, 0
    %v400 = vsel %vm58, %v391, 0
    %402 = vmatpush.msra.mxu0 0.0
    %403 = vmatpush.msra.mxu0 0.0
    %404 = vmatpush.msra.mxu0 0.0
    %405 = vmatpush.msra.mxu0 0.0
    %406 = vmatpush.msra.mxu0 0.0
    %407 = vmatpush.msra.mxu0 0.0
    %408 = vmatpush.msra.mxu0 0.0
    %409 = vmatpush.msra.mxu0 0.0
    %410 = vmatpush.msra.mxu0 0.0
    %411 = vmatpush.msra.mxu0 0.0
    %412 = vmatpush.msra.mxu0 0.0
    %413 = vmatpush.msra.mxu0 0.0
    %414 = vmatpush.msra.mxu0 %v395
    %415 = vmatpush.msra.mxu0 %v394
    %416 = vmatpush.msra.mxu0 %v393
    %417 = vmatpush.msra.mxu0 %v392
    %418 = vmatmul.f32.gmra.mxu0 %v397
    %v419 = vpop.f32.mrf.mxu0
    %v420 = vadd.f32 0.0, %v419
    %421 = vmatmul.f32.gmra.mxu0 %v400
    %v422 = vpop.f32.mrf.mxu0
    %v423 = vadd.f32 0.0, %v422
    %424 = vdwg.mxu0
    %v425 = vmax.f32 %v420, 0.0
    %v426 = vmax.f32 %v423, 0.0
    %v427 = vld [vmem:[%s9] sm:$0xff]
    %v428 = vld [vmem:[%s9 + $0x8] sm:$0xff]
    %v429 = vld [vmem:[%s9 + $0x10] sm:$0xff]
    %v430 = vld [vmem:[%s9 + $0x18] sm:$0xff]
    %v431 = vld [vmem:[%s9 + $0x20] sm:$0xff]
    %v432 = vld [vmem:[%s9 + $0x28] sm:$0xff]
    %v433 = vld [vmem:[%s9 + $0x30] sm:$0xff]
    %v434 = vld [vmem:[%s9 + $0x38] sm:$0xff]
    %vm435 = vcmask 523264
    %v437 = vsel %vm435, %v425, 0
    %v440 = vsel %vm435, %v426, 0
    %442 = vmatpush.msra.mxu0 0.0
    %443 = vmatpush.msra.mxu0 0.0
    %444 = vmatpush.msra.mxu0 0.0
    %445 = vmatpush.msra.mxu0 0.0
    %446 = vmatpush.msra.mxu0 0.0
    %447 = vmatpush.msra.mxu0 0.0
    %448 = vmatpush.msra.mxu0 0.0
    %449 = vmatpush.msra.mxu0 0.0
    %450 = vmatpush.msra.mxu0 %v434
    %451 = vmatpush.msra.mxu0 %v433
    %452 = vmatpush.msra.mxu0 %v432
    %453 = vmatpush.msra.mxu0 %v431
    %454 = vmatpush.msra.mxu0 %v430
    %455 = vmatpush.msra.mxu0 %v429
    %456 = vmatpush.msra.mxu0 %v428
    %457 = vmatpush.msra.mxu0 %v427
    %458 = vmatmul.f32.gmra.mxu0 %v437
    %v459 = vpop.f32.mrf.mxu0
    %v460 = vadd.f32 %v390, %v459
    %461 = vmatmul.f32.gmra.mxu0 %v440
    %v462 = vpop.f32.mrf.mxu0
    %v463 = vadd.f32 %v391, %v462
    %464 = vdwg.mxu0
    %v465 = vld [vmem:[%s12] sm:$0x1]
    %v466 = vld [vmem:[%s13] sm:$0x1]
    %v467 = vsel %vm58, %v460, 0.0
    %468 = vadd.xlane.f32.xlu0 %v467
    %v469 = vpop.xlane.xlu0 %468
    %v470 = vsel %vm58, %v463, 0.0
    %471 = vadd.xlane.f32.xlu0 %v470
    %v472 = vpop.xlane.xlu0 %471
    %v473 = vmul.f32 %v469, %v343
    %v474 = vmul.f32 %v472, %v343
    %v475 = vsub.f32 %v460, %v473
    %v476 = vsub.f32 %v463, %v474
    %v477 = vmul.f32 %v475, %v475
    %v478 = vmul.f32 %v476, %v476
    %v479 = vsel %vm58, %v477, 0.0
    %480 = vadd.xlane.f32.xlu0 %v479
    %v481 = vpop.xlane.xlu0 %480
    %v482 = vsel %vm58, %v478, 0.0
    %483 = vadd.xlane.f32.xlu0 %v482
    %v484 = vpop.xlane.xlu0 %483
    %v485 = vmul.f32 %v481, %v343
    %v486 = vmul.f32 %v484, %v343
    %v487 = vadd.f32 %v485, 1e-05
    %v488 = vadd.f32 %v486, 1e-05
    %v489 = vrsqrt.pop %v487
    %v490 = vmul.f32 %v489, %v487
    %v491 = vmul.f32 %v490, %v489
    %v492 = vmul.f32 0.5, %v491
    %v493 = vsub.f32 1.5, %v492
    %v494 = vmul.f32 %v489, %v493
    %vm495 = vweird.f32 %v487
    %vm496 = vweird.f32 %v489
    %vm497 = vmor %vm495, %vm496
    %v498 = vsel %vm497, %v489, %v494
    %v499 = vrsqrt.pop %v488
    %v500 = vmul.f32 %v499, %v488
    %v501 = vmul.f32 %v500, %v499
    %v502 = vmul.f32 0.5, %v501
    %v503 = vsub.f32 1.5, %v502
    %v504 = vmul.f32 %v499, %v503
    %vm505 = vweird.f32 %v488
    %vm506 = vweird.f32 %v499
    %vm507 = vmor %vm505, %vm506
    %v508 = vsel %vm507, %v499, %v504
    %v509 = vmul.f32 %v475, %v498
    %v510 = vmul.f32 %v476, %v508
    %v512 = vperm.slane %v465, 0
    %v514 = vmul.f32 %v509, %v512
    %v515 = vmul.f32 %v510, %v512
    %v517 = vperm.slane %v466, 0
    %v519 = vadd.f32 %v514, %v517
    %v520 = vadd.f32 %v515, %v517
    %521 = vst.msk [vmem:[#allocation2] sm:$0xff] %vm58, %v519
    %522 = vst.msk [vmem:[#allocation2 + $0x8] sm:$0xff] %vm58, %v520
    // Predicated region
    $region58: #{tpu_custom_call.1} parent=1 // pred_check
      _
    $region59: #{tpu_custom_call.1} parent=1 // pred_check_branch
      %524 = sbr.rel (0) target = $region61
    $region60: #{tpu_custom_call.1} parent=1 // pred_region
      %526 = vsyncadd [#allocation3], 0
      %s527 = sshll.u32 [#allocation2], 4
      %s528 = int_to_ptr.vmem [resolvable:$true] %s527
      %s529 = sshll.u32 %s14, 4
      %s530 = int_to_ptr.hbm [resolvable:$true] %s529
      %535 = dma.vmem_to_hbm [thread:$0]  %s528, 256, %s530, [#allocation3], 128, 128, 8
    $region61: #{tpu_custom_call.1} parent=1 // pred_fallthru
      _
    // Predicated region
    $region62: #{tpu_custom_call.1} parent=1 // pred_check
      _
    $region63: #{tpu_custom_call.1} parent=1 // pred_check_branch
      %537 = sbr.rel (0) target = $region65
    $region64: #{tpu_custom_call.1} parent=1 // pred_region
      %539 = dma.done [#allocation3], 256
    $region65: #{tpu_custom_call.1} parent=1 // pred_fallthru
      _
    %540 = vsyncpa [#allocation3], 1

</llo_original>
